<compile_context>
chip_gen: v6e
topology: v6e:2x2x1
jax: 0.10.0
libtpu: 0.0.40
codegen_flags: <defaults>
</compile_context>

<pallas_src>
import functools

import jax
import jax.numpy as jnp
from jax.experimental import pallas as pl
from jax.experimental.pallas import tpu as pltpu


def _round_up(x, m):
    return ((x + m - 1) // m) * m


def _cdiv(a, b):
    return (a + b - 1) // b


# Conservative per-step VMEM budget (double-buffered tiles) that fits every
# current generation once vmem_limit_bytes is raised (v7x physical VMEM per
# TC is 64 MiB, so stay well under it).
_VMEM_BUDGET_BYTES = 40 * 2**20


def _c_plan(num_classes, tile_c):
    """C-tiling plan. Depends only on (num_classes, tile_c) so the prepared
    anchors are valid for any batch size."""
    c128 = _round_up(num_classes, 128)
    n_c = _cdiv(c128, tile_c)
    tc = _round_up(_cdiv(c128, n_c), 128)   # minimize padding, lane multiple
    c_pad = n_c * tc
    return tc, c_pad, n_c


def _per_step_vmem_bytes(tb, tc, d_pad, out_itemsize):
    # features (bf16, dbl-buf) + anchors (bf16, dbl-buf) + out (dbl-buf) + inv.
    return (2 * tb * d_pad * 2) + (2 * d_pad * tc * 2) + (2 * tb * tc * out_itemsize) + (2 * tb * 4)


def prepare_anchors(anchor_points, *, tile_c=1024):
    """One-time anchor prep: bf16 cast + zero-pad + transpose -> (d_pad, c_pad).

    Call at init and after each EMA update, never in the per-call hot path.
    Zero-padded rows/cols are exact (they contribute nothing)."""
    C, D = anchor_points.shape
    d_pad = _round_up(D, 128)
    _, c_pad, _ = _c_plan(C, tile_c)
    a = anchor_points.astype(jnp.bfloat16)
    if (c_pad, d_pad) != (C, D):
        a = jnp.pad(a, ((0, c_pad - C), (0, d_pad - D)))
    return a.T  # (d_pad, c_pad)


def _anchor_kernel(x_ref, at_ref, inv_ref, o_ref):
    # x_ref  : (tb, d_pad)  bf16 un-normalized feature tile
    # at_ref : (d_pad, tc)  bf16 pre-transposed anchor tile
    # inv_ref: (tb, 1)      f32 precomputed 1/||x|| (0 for padded rows)
    # o_ref  : (tb, tc)     logits tile (f32 or bf16)
    #
    # diag(1/||x||) . (x @ A^T) == normalize(x) @ A^T, so the row scale is
    # applied to the (small) MXU output instead of the (large) input operand.
    acc = jnp.dot(x_ref[...], at_ref[...], preferred_element_type=jnp.float32)
    o_ref[...] = (acc * inv_ref[...]).astype(o_ref.dtype)


@functools.partial(
    jax.jit, static_argnames=("num_classes", "tile_b", "tile_c", "out_dtype")
)
def _forward(features, anchors_t, *, num_classes, tile_b, tile_c, out_dtype):
    """features: [B, D] (any float dtype), anchors_t: [d_pad, c_pad] bf16."""
    B, D = features.shape
    d_pad, c_pad = anchors_t.shape
    assert d_pad == _round_up(D, 128), "anchors were prepared for a different D"

    tc, c_pad2, n_c = _c_plan(num_classes, tile_c)
    assert c_pad2 == c_pad, "anchors were prepared with a different tile_c"

    out_itemsize = jnp.dtype(out_dtype).itemsize

    # ---- B tiling: minimize padding waste, respect VMEM, feed megacore. ----
    b8 = _round_up(B, 8)
    n_b = _cdiv(b8, tile_b)
    tb = _round_up(_cdiv(b8, n_b), 8)
    # Shrink tb if the per-step working set exceeds the VMEM budget
    # (tc is fixed by the prepared anchors).
    while _per_step_vmem_bytes(tb, tc, d_pad, out_itemsize) > _VMEM_BUDGET_BYTES and tb > 8:
        tb = max(8, _round_up(tb // 2, 8))
    # v7x megacore: make sure at least one "parallel" axis has >= 2 steps.
    if n_c == 1 and _cdiv(b8, tb) == 1 and b8 >= 16:
        tb = _round_up(_cdiv(b8, 2), 8)
    n_b = _cdiv(b8, tb)
    b_pad = n_b * tb

    # ---- Wrapper-side prep (one fused pass over features). ----------------
    xf32 = features.astype(jnp.float32)
    sumsq = jnp.sum(xf32 * xf32, axis=1, keepdims=True)              # (B, 1)
    inv_norm = jax.lax.rsqrt(jnp.maximum(sumsq, 1e-24))              # = 1/max(||x||,1e-12)
    x = features.astype(jnp.bfloat16)
    if b_pad != B or d_pad != D:
        x = jnp.pad(x, ((0, b_pad - B), (0, d_pad - D)))
    if b_pad != B:
        # Padded rows get inv_norm = 0 -> their logits are exactly 0.
        inv_norm = jnp.pad(inv_norm, ((0, b_pad - B), (0, 0)))

    per_step = _per_step_vmem_bytes(tb, tc, d_pad, out_itemsize)
    vmem_limit = int(min(max(2 * per_step, 32 * 2**20), 48 * 2**20))

    # Grid: C tiles outer, B tiles inner -> anchor tile reused across B tiles.
    out = pl.pallas_call(
        _anchor_kernel,
        out_shape=jax.ShapeDtypeStruct((b_pad, c_pad), out_dtype),
        grid_spec=pl.GridSpec(
            grid=(n_c, n_b),
            in_specs=[
                pl.BlockSpec((tb, d_pad), lambda j, i: (i, 0)),   # features
                pl.BlockSpec((d_pad, tc), lambda j, i: (0, j)),   # anchors^T
                pl.BlockSpec((tb, 1), lambda j, i: (i, 0)),       # 1/||x||
            ],
            out_specs=pl.BlockSpec((tb, tc), lambda j, i: (i, j)),
        ),
        compiler_params=pltpu.CompilerParams(
            dimension_semantics=("parallel", "parallel"),
            vmem_limit_bytes=vmem_limit,
        ),
    )(x, anchors_t, inv_norm)

    # Slice only when padding was actually inserted (slicing a writeback-bound
    # output would otherwise double its HBM bytes).
    if b_pad != B or c_pad != num_classes:
        out = out[:B, :num_classes]
    return out


class AdaptiveTailAnchorTPU:
    """JAX/Pallas port of AdaptiveTailAnchor. Anchors are stored both as the
    f32 master copy (for EMA updates) and as the pre-transposed/padded bf16
    array the kernel consumes, rebuilt only when the anchors change."""

    def __init__(self, anchor_points, *, smoothing_coeff=0.5,
                 tile_b=256, tile_c=1024, out_dtype=jnp.float32):
        self.smoothing_coeff = float(smoothing_coeff)
        self.tile_b = int(tile_b)
        self.tile_c = int(tile_c)
        self.out_dtype = out_dtype
        self.anchor_points = jnp.asarray(anchor_points, jnp.float32)
        self.num_classes, self.feature_dim = self.anchor_points.shape
        self._anchors_t = prepare_anchors(self.anchor_points, tile_c=self.tile_c)

    # TODO(synk): update_anchor is a stateful single-row EMA parameter update
    # with no useful kernel equivalent; it stays in plain JAX and simply
    # re-prepares the kernel-side anchor array afterwards.
    def update_anchor(self, new_prototype, class_idx):
        p = jnp.asarray(new_prototype, jnp.float32)
        p = p / jnp.maximum(jnp.linalg.norm(p), 1e-12)
        old = self.anchor_points[class_idx]
        mixed = self.smoothing_coeff * p + (1.0 - self.smoothing_coeff) * old
        mixed = mixed / jnp.maximum(jnp.linalg.norm(mixed), 1e-12)
        self.anchor_points = self.anchor_points.at[class_idx].set(mixed)
        self._anchors_t = prepare_anchors(self.anchor_points, tile_c=self.tile_c)

    def __call__(self, features):
        return _forward(
            features, self._anchors_t,
            num_classes=self.num_classes,
            tile_b=self.tile_b, tile_c=self.tile_c,
            out_dtype=self.out_dtype,
        )


def init_anchor_points(key, num_classes, feature_dim):
    """Mimics nn.Parameter(F.normalize(torch.randn(C, D), p=2, dim=1))."""
    a = jax.random.normal(key, (num_classes, feature_dim), dtype=jnp.float32)
    norm = jnp.maximum(jnp.linalg.norm(a, axis=1, keepdims=True), 1e-12)
    return a / norm


if __name__ == "__main__":
    # Small shapes consistent with the module (feature_dim / num_classes
    # scaled down). B and C deliberately NOT multiples of 8/128 to exercise
    # the padding path.
    B, D, C = 12, 256, 100
    key = jax.random.PRNGKey(0)
    k_feat, k_anchor = jax.random.split(key)

    features = jax.random.normal(k_feat, (B, D), dtype=jnp.float32)
    anchor_points = init_anchor_points(k_anchor, C, D)

    # Reference in plain f32 JAX.
    fn = features / jnp.maximum(
        jnp.linalg.norm(features, axis=1, keepdims=True), 1e-12
    )
    ref = fn @ anchor_points.T

    # f32-output path (default).
    module = AdaptiveTailAnchorTPU(anchor_points)
    logits = jax.block_until_ready(module(features))
    assert logits.shape == (B, C)
    assert logits.dtype == jnp.float32
    err = float(jnp.max(jnp.abs(logits - ref)))
    assert err < 2e-2, err

    # bf16-output path (halves the dominant HBM write stream).
    module_bf16 = AdaptiveTailAnchorTPU(anchor_points, out_dtype=jnp.bfloat16)
    logits_bf16 = jax.block_until_ready(module_bf16(features))
    assert logits_bf16.shape == (B, C)
    err16 = float(jnp.max(jnp.abs(logits_bf16.astype(jnp.float32) - ref)))
    assert err16 < 5e-2, err16

    print("KERNEL_OK")
</pallas_src>

<mosaic_0001>
module attributes {stable_mosaic.version = 11 : i64} {
  func.func @_anchor_kernel(%arg0: i32, %arg1: i32, %arg2: memref<8x256xbf16, #tpu.memory_space<vmem>>, %arg3: memref<256x128xbf16, #tpu.memory_space<vmem>>, %arg4: memref<8x1xf32, #tpu.memory_space<vmem>>, %arg5: memref<8x128xf32, #tpu.memory_space<vmem>>) attributes {dimension_semantics = [#tpu.dimension_semantics<parallel>, #tpu.dimension_semantics<parallel>], iteration_bounds = array<i64: 1, 2>, scalar_prefetch = 0 : i64, scratch_operands = 0 : i64, tpu.core_type = #tpu.core_type<tc>, window_params = [{transform_indices = @transform_0, window_bounds = array<i64: 8, 256>}, {transform_indices = @transform_1, window_bounds = array<i64: 256, 128>}, {transform_indices = @transform_2, window_bounds = array<i64: 8, 1>}, {transform_indices = @transform_3, window_bounds = array<i64: 8, 128>}]} {
    %c0 = arith.constant 0 : index
    %c0_0 = arith.constant 0 : index
    %0 = vector.load %arg2[%c0, %c0_0] : memref<8x256xbf16, #tpu.memory_space<vmem>>, vector<8x256xbf16>
    %c0_1 = arith.constant 0 : index
    %c0_2 = arith.constant 0 : index
    %1 = vector.load %arg3[%c0_1, %c0_2] : memref<256x128xbf16, #tpu.memory_space<vmem>>, vector<256x128xbf16>
    %cst = arith.constant dense<0.000000e+00> : vector<8x128xf32>
    %2 = tpu.matmul %0, %1, %cst {dimension_numbers = #tpu.dot_dimension_numbers<[1], [0], [0], [1], [0, 0, 1, 1], [], []>} : vector<8x256xbf16>, vector<256x128xbf16>, vector<8x128xf32> -> vector<8x128xf32>
    %c0_3 = arith.constant 0 : index
    %c0_4 = arith.constant 0 : index
    %3 = vector.load %arg4[%c0_3, %c0_4] : memref<8x1xf32, #tpu.memory_space<vmem>>, vector<8x1xf32>
    %4 = vector.broadcast %3 : vector<8x1xf32> to vector<8x128xf32>
    %5 = arith.mulf %2, %4 : vector<8x128xf32>
    %c0_5 = arith.constant 0 : index
    %c0_6 = arith.constant 0 : index
    %6 = vector.load %arg5[%c0_5, %c0_6] : memref<8x128xf32, #tpu.memory_space<vmem>>, vector<8x128xf32>
    tpu.vector_store %arg5[%c0_5, %c0_6], %5 {strides = array<i32>} : memref<8x128xf32, #tpu.memory_space<vmem>>, vector<8x128xf32>,
    return
  }
  func.func @transform_0(%arg0: i32, %arg1: i32) -> (i32, i32) {
    %c0_i32 = arith.constant 0 : i32
    %c0_i32_0 = arith.constant 0 : i32
    return %arg1, %c0_i32 : i32, i32
  }
  func.func @transform_1(%arg0: i32, %arg1: i32) -> (i32, i32) {
    %c0_i32 = arith.constant 0 : i32
    %c0_i32_0 = arith.constant 0 : i32
    return %c0_i32, %arg0 : i32, i32
  }
  func.func @transform_2(%arg0: i32, %arg1: i32) -> (i32, i32) {
    %c0_i32 = arith.constant 0 : i32
    %c0_i32_0 = arith.constant 0 : i32
    return %arg1, %c0_i32 : i32, i32
  }
  func.func @transform_3(%arg0: i32, %arg1: i32) -> (i32, i32) {
    %c0_i32 = arith.constant 0 : i32
    return %arg1, %arg0 : i32, i32
  }
}

</mosaic_0001>

<llo_original>
// kernel: _forward.1
$region0: #{_forward.1}
  #allocation0 [shape = 'u32[]', space=smem, size = 0x4, offset = 0x4, fixed_abs, tag = 'smem constant byte address 0x4 - core index']
  #allocation1 [shape = 'u32[144,128]{1,0:T(1,128)}', space=vmem, size = 0x12000, scoped, tag = 'internal scratch']
  %s0 = inlined_call_operand.vmem [shape: bf16[16,256], index: 0, kind: input, shape index: {}]
  %s1 = inlined_call_operand.vmem [shape: bf16[256,128], index: 1, kind: input, shape index: {}]
  %s2 = inlined_call_operand.vmem [shape: f32[16,1], index: 2, kind: input, shape index: {}]
  %s3 = inlined_call_operand.hbm [shape: f32[16,128], index: 3, kind: output, shape index: {}]
  %s4 = sld [smem:[#allocation0]]
  $region45: #{_forward.1} parent=0
    _
  %s6 = ssub.s32 1, %s4
  %s7 = scalar_select 0, %s6, %s4
  $region1: #{_forward.1} parent=0
    #allocation2 [shape = 'u8[8192]{0}', space=vmem, size = 0x2000, scoped, tag = 'output window, operand 0']
    #allocation3 [shape = 's32[2]{0}', space=sflag, size = 0x8, scoped, tag = 'scoped memory for _forward.1']
    %8 = vsyncpa [#allocation3], 0
    %s9 = scalar_lea.sflag [#allocation3], 1
    %10 = vsyncpa %s9, 0
    loop: start=0, step=1, limit=4
    $region2: #{_forward.1} parent=1 // loop_pre_header
      _
    $region3: #{_forward.1} parent=1 // loop_header
      %s12 = sphi 0, %s16
      %p13 = scmp.ge.s32.totalorder %s12, 4
      %s19 = sphi 0, %s31
      %s20 = sphi 0, %s27
      %s21 = sphi 0, %s19
      %s22 = sphi 0, %s20
      %s23 = sphi 0, %s21
      %s24 = sphi 0, %s22
      %s34 = sphi 0, %s36
      %s37 = sphi 0, %s34
      %s38 = sphi 0, %s37
      %s54 = sphi 0, %s38
      %s60 = sphi 0, %s62
      %s63 = sphi 0, %s60
      %s64 = sphi 0, %s63
      %s80 = sphi 0, %s64
      %s86 = sphi 0, %s88
      %s89 = sphi 0, %s86
      %s90 = sphi 0, %s89
      %s106 = sphi 0, %s90
      %s114 = sphi 0, %s116
      %s117 = sphi 0, %s114
      %s118 = sphi 0, %s117
      %s134 = sphi 0, %s118
    $region4: #{_forward.1} parent=1 // loop_header_branch
      %15 = sbr.rel (%p13) target = $region8
    $region5: #{_forward.1} parent=1 // loop_body
      %s17 = ssub.s32 %s12, 1
      %s18 = ssub.s32 %s12, 2
      %s25 = sadd.s32 1, %s20
      %p26 = scmp.ge.s32.totalorder %s25, 2
      %s27 = scalar_select %p26, 0, %s25
      %s28 = sadd.s32 1, %s19
      %s29 = scalar_select %p26, %s28, %s19
      %p30 = scmp.ge.s32.totalorder %s29, 1
      %s31 = scalar_select %p30, 0, %s29
      %s32 = ssub.s32 %s20, %s27
      %p33 = scmp.eq.s32.totalorder %s32, 0
      %s35 = sadd.s32 %s34, 1
      %s36 = scalar_select %p33, %s34, %s35
      %p39 = pneg %p33
      %p40 = scmp.eq.s32.totalorder %s12, 1
      %p41 = por %p39, %p40
      %p42 = scmp.ne.s32.totalorder %s34, %s37
      %p43 = scmp.eq.s32.totalorder %s12, 0
      %p44 = por %p42, %p43
      %p45 = scmp.ne.s32.totalorder %s34, %s37
      %p46 = scmp.eq.s32.totalorder %s17, 1
      %p47 = por %p45, %p46
      %p48 = scmp.ne.s32.totalorder %s37, %s38
      %p49 = scmp.eq.s32.totalorder %s17, 0
      %p50 = por %p48, %p49
      %p51 = scmp.ne.s32.totalorder %s37, %s38
      %p52 = scmp.eq.s32.totalorder %s18, 1
      %p53 = por %p51, %p52
      %p55 = scmp.ne.s32.totalorder %s38, %s54
      %p56 = scmp.eq.s32.totalorder %s18, 0
      %p57 = por %p55, %p56
      %s58 = ssub.s32 %s19, %s31
      %p59 = scmp.eq.s32.totalorder %s58, 0
      %s61 = sadd.s32 %s60, 1
      %s62 = scalar_select %p59, %s60, %s61
      %p65 = pneg %p59
      %p66 = scmp.eq.s32.totalorder %s12, 1
      %p67 = por %p65, %p66
      %p68 = scmp.ne.s32.totalorder %s60, %s63
      %p69 = scmp.eq.s32.totalorder %s12, 0
      %p70 = por %p68, %p69
      %p71 = scmp.ne.s32.totalorder %s60, %s63
      %p72 = scmp.eq.s32.totalorder %s17, 1
      %p73 = por %p71, %p72
      %p74 = scmp.ne.s32.totalorder %s63, %s64
      %p75 = scmp.eq.s32.totalorder %s17, 0
      %p76 = por %p74, %p75
      %p77 = scmp.ne.s32.totalorder %s63, %s64
      %p78 = scmp.eq.s32.totalorder %s18, 1
      %p79 = por %p77, %p78
      %p81 = scmp.ne.s32.totalorder %s64, %s80
      %p82 = scmp.eq.s32.totalorder %s18, 0
      %p83 = por %p81, %p82
      %s84 = ssub.s32 %s20, %s27
      %p85 = scmp.eq.s32.totalorder %s84, 0
      %s87 = sadd.s32 %s86, 1
      %s88 = scalar_select %p85, %s86, %s87
      %p91 = pneg %p85
      %p92 = scmp.eq.s32.totalorder %s12, 1
      %p93 = por %p91, %p92
      %p94 = scmp.ne.s32.totalorder %s86, %s89
      %p95 = scmp.eq.s32.totalorder %s12, 0
      %p96 = por %p94, %p95
      %p97 = scmp.ne.s32.totalorder %s86, %s89
      %p98 = scmp.eq.s32.totalorder %s17, 1
      %p99 = por %p97, %p98
      %p100 = scmp.ne.s32.totalorder %s89, %s90
      %p101 = scmp.eq.s32.totalorder %s17, 0
      %p102 = por %p100, %p101
      %p103 = scmp.ne.s32.totalorder %s89, %s90
      %p104 = scmp.eq.s32.totalorder %s18, 1
      %p105 = por %p103, %p104
      %p107 = scmp.ne.s32.totalorder %s90, %s106
      %p108 = scmp.eq.s32.totalorder %s18, 0
      %p109 = por %p107, %p108
      %s110 = ssub.s32 %s20, %s27
      %s111 = ssub.s32 %s19, %s31
      %s112 = sor.u32 %s110, %s111
      %p113 = scmp.eq.s32.totalorder %s112, 0
      %s115 = sadd.s32 %s114, 1
      %s116 = scalar_select %p113, %s114, %s115
      %p119 = pneg %p113
      %p120 = scmp.eq.s32.totalorder %s12, 1
      %p121 = por %p119, %p120
      %p122 = scmp.ne.s32.totalorder %s114, %s117
      %p123 = scmp.eq.s32.totalorder %s12, 0
      %p124 = por %p122, %p123
      %p125 = scmp.ne.s32.totalorder %s114, %s117
      %p126 = scmp.eq.s32.totalorder %s17, 1
      %p127 = por %p125, %p126
      %p128 = scmp.ne.s32.totalorder %s117, %s118
      %p129 = scmp.eq.s32.totalorder %s17, 0
      %p130 = por %p128, %p129
      %p131 = scmp.ne.s32.totalorder %s117, %s118
      %p132 = scmp.eq.s32.totalorder %s18, 1
      %p133 = por %p131, %p132
      %p135 = scmp.ne.s32.totalorder %s118, %s134
      %p136 = scmp.eq.s32.totalorder %s18, 0
      %p137 = por %p135, %p136
      %p138 = scmp.le.s32.totalorder 1, %s12
      %p139 = scmp.lt.s32.totalorder %s12, 3
      %p140 = pnand %p138, %p139
      %p141 = pneg %p140
      // Predicated region
      $region9: #{_forward.1} parent=5 // pred_check
        _
      $region10: #{_forward.1} parent=5 // pred_check_branch
        %143 = sbr.rel (%p140) target = $region12
      $region11: #{_forward.1} parent=5 // pred_region
        %s144 = ssub.s32 %s12, 1
        // Predicated region
        $region13: #{_forward.1} parent=11 // pred_check
          %p145 = pneg %p76
        $region14: #{_forward.1} parent=11 // pred_check_branch
          %147 = sbr.rel (%p145) target = $region16
        $region15: #{_forward.1} parent=11 // pred_region
          %p148 = scmp.lt.s32.totalorder %s21, 0
          %s149 = scalar_select %p148, %s21, 0
          %s150 = smul.addr %s149, 4
          %s151 = scalar_lea.vmem %s1, %s150
        $region16: #{_forward.1} parent=11 // pred_fallthru
          _
      $region12: #{_forward.1} parent=5 // pred_fallthru
        _
      %p152 = scmp.lt.s32.totalorder %s12, 2
      // Predicated region
      $region17: #{_forward.1} parent=5 // pred_check
        %p153 = pneg %p152
      $region18: #{_forward.1} parent=5 // pred_check_branch
        %155 = sbr.rel (%p153) target = $region20
      $region19: #{_forward.1} parent=5 // pred_region
        // Predicated region
        $region21: #{_forward.1} parent=19 // pred_check
          %p156 = pneg %p44
        $region22: #{_forward.1} parent=19 // pred_check_branch
          %158 = sbr.rel (%p156) target = $region24
        $region23: #{_forward.1} parent=19 // pred_region
          %p159 = scmp.lt.s32.totalorder %s20, 1
          %s160 = scalar_select %p159, %s20, 1
          %s161 = smul.addr %s160, 2
          %s162 = smul.addr %s161, 4
          %s163 = scalar_lea.vmem %s0, %s162
        $region24: #{_forward.1} parent=19 // pred_fallthru
          _
        // Predicated region
        $region25: #{_forward.1} parent=19 // pred_check
          %p164 = pneg %p96
        $region26: #{_forward.1} parent=19 // pred_check_branch
          %166 = sbr.rel (%p164) target = $region28
        $region27: #{_forward.1} parent=19 // pred_region
          %p167 = scmp.lt.s32.totalorder %s20, 1
          %s168 = scalar_select %p167, %s20, 1
          %s169 = smul.addr %s168, 8
          %s170 = scalar_lea.vmem %s2, %s169
        $region28: #{_forward.1} parent=19 // pred_fallthru
          _
      $region20: #{_forward.1} parent=5 // pred_fallthru
        _
      %p171 = scmp.le.s32.totalorder 1, %s12
      %p172 = scmp.lt.s32.totalorder %s12, 3
      %p173 = pnand %p171, %p172
      %p174 = pneg %p173
      // Predicated region
      $region29: #{_forward.1} parent=5 // pred_check
        _
      $region30: #{_forward.1} parent=5 // pred_check_branch
        %176 = sbr.rel (%p173) target = $region32
      $region31: #{_forward.1} parent=5 // pred_region
        %s177 = ssub.s32 %s12, 1
        %p178 = scmp.lt.s32.totalorder %s22, 1
        %s179 = scalar_select %p178, %s22, 1
        %s180 = smul.addr %s179, 2
        %s181 = smul.addr %s180, 4
        %s182 = scalar_lea.vmem %s0, %s181
        %p183 = pneg %p50
        %p184 = pneg %p47
        %p185 = scmp.lt.s32.totalorder %s21, 0
        %s186 = scalar_select %p185, %s21, 0
        %s187 = smul.addr %s186, 4
        %s188 = scalar_lea.vmem %s1, %s187
        %p189 = pneg %p76
        %p190 = pneg %p73
        %p191 = scmp.lt.s32.totalorder %s22, 1
        %s192 = scalar_select %p191, %s22, 1
        %s193 = smul.addr %s192, 8
        %s194 = scalar_lea.vmem %s2, %s193
        %p195 = pneg %p102
        %p196 = pneg %p99
        %p197 = pneg %p130
        %p198 = pneg %p127
        %s199 = sand.u32 %s117, 1
        %s200 = scalar_lea.sflag [#allocation3], %s199
        %s201 = sand.u32 %s117, 1
        %s202 = smul.addr %s201, 8
        %s203 = scalar_lea.vmem [#allocation2], %s202
        %p204 = scmp.lt.s32.totalorder %s22, 1
        %s205 = scalar_select %p204, %s22, 1
        %s206 = smul.addr %s205, 2
        %s207 = smul.addr %s206, 4
        %s208 = scalar_lea.vmem %s0, %s207
        %p209 = scmp.lt.s32.totalorder %s21, 0
        %s210 = scalar_select %p209, %s21, 0
        %s211 = smul.addr %s210, 4
        %s212 = scalar_lea.vmem %s1, %s211
        %p213 = scmp.lt.s32.totalorder %s22, 1
        %s214 = scalar_select %p213, %s22, 1
        %s215 = smul.addr %s214, 8
        %s216 = scalar_lea.vmem %s2, %s215
        %v218 = vld [vmem:[%s208] sm:$0xff]
        %v219 = vld [vmem:[%s212] sm:$0xf]
        %v220 = vld [vmem:[%s212 + $0x4] sm:$0xf]
        %v221 = vld [vmem:[%s212 + $0x8] sm:$0xf]
        %v222 = vld [vmem:[%s212 + $0xc] sm:$0xf]
        %v223 = vld [vmem:[%s212 + $0x10] sm:$0xf]
        %v224 = vld [vmem:[%s212 + $0x14] sm:$0xf]
        %v225 = vld [vmem:[%s212 + $0x18] sm:$0xf]
        %v226 = vld [vmem:[%s212 + $0x1c] sm:$0xf]
        %v227 = vld [vmem:[%s212 + $0x20] sm:$0xf]
        %v228 = vld [vmem:[%s212 + $0x24] sm:$0xf]
        %v229 = vld [vmem:[%s212 + $0x28] sm:$0xf]
        %v230 = vld [vmem:[%s212 + $0x2c] sm:$0xf]
        %v231 = vld [vmem:[%s212 + $0x30] sm:$0xf]
        %v232 = vld [vmem:[%s212 + $0x34] sm:$0xf]
        %v233 = vld [vmem:[%s212 + $0x38] sm:$0xf]
        %v234 = vld [vmem:[%s212 + $0x3c] sm:$0xf]
        %v235 = vld [vmem:[%s212 + $0x40] sm:$0xf]
        %v236 = vld [vmem:[%s212 + $0x44] sm:$0xf]
        %v237 = vld [vmem:[%s212 + $0x48] sm:$0xf]
        %v238 = vld [vmem:[%s212 + $0x4c] sm:$0xf]
        %v239 = vld [vmem:[%s212 + $0x50] sm:$0xf]
        %v240 = vld [vmem:[%s212 + $0x54] sm:$0xf]
        %v241 = vld [vmem:[%s212 + $0x58] sm:$0xf]
        %v242 = vld [vmem:[%s212 + $0x5c] sm:$0xf]
        %v243 = vld [vmem:[%s212 + $0x60] sm:$0xf]
        %v244 = vld [vmem:[%s212 + $0x64] sm:$0xf]
        %v245 = vld [vmem:[%s212 + $0x68] sm:$0xf]
        %v246 = vld [vmem:[%s212 + $0x6c] sm:$0xf]
        %v247 = vld [vmem:[%s212 + $0x70] sm:$0xf]
        %v248 = vld [vmem:[%s212 + $0x74] sm:$0xf]
        %v249 = vld [vmem:[%s212 + $0x78] sm:$0xf]
        %v250 = vld [vmem:[%s212 + $0x7c] sm:$0xf]
        %v252 = vunpack.c.l.b16 %v218
        %v253 = vunpack.c.h.b16 %v218
        %v254 = vpack.c.b16 %v252, %v252
        %v255 = vpack.c.b16 %v253, %v253
        %v290 = vunpack.c.l.b16 %v219
        %v291 = vunpack.c.l.b16 %v220
        %v292 = vunpack.c.l.b16 %v221
        %v293 = vunpack.c.l.b16 %v222
        %v294 = vunpack.c.l.b16 %v223
        %v295 = vunpack.c.l.b16 %v224
        %v296 = vunpack.c.l.b16 %v225
        %v297 = vunpack.c.l.b16 %v226
        %v298 = vunpack.c.l.b16 %v227
        %v299 = vunpack.c.l.b16 %v228
        %v300 = vunpack.c.l.b16 %v229
        %v301 = vunpack.c.l.b16 %v230
        %v302 = vunpack.c.l.b16 %v231
        %v303 = vunpack.c.l.b16 %v232
        %v304 = vunpack.c.l.b16 %v233
        %v305 = vunpack.c.l.b16 %v234
        %v306 = vunpack.c.l.b16 %v235
        %v307 = vunpack.c.l.b16 %v236
        %v308 = vunpack.c.l.b16 %v237
        %v309 = vunpack.c.l.b16 %v238
        %v310 = vunpack.c.l.b16 %v239
        %v311 = vunpack.c.l.b16 %v240
        %v312 = vunpack.c.l.b16 %v241
        %v313 = vunpack.c.l.b16 %v242
        %v314 = vunpack.c.l.b16 %v243
        %v315 = vunpack.c.l.b16 %v244
        %v316 = vunpack.c.l.b16 %v245
        %v317 = vunpack.c.l.b16 %v246
        %v318 = vunpack.c.l.b16 %v247
        %v319 = vunpack.c.l.b16 %v248
        %v320 = vunpack.c.l.b16 %v249
        %v321 = vunpack.c.l.b16 %v250
        %v322 = vpack.c.b16 %v291, %v290
        %v323 = vpack.c.b16 %v293, %v292
        %v324 = vpack.c.b16 %v295, %v294
        %v325 = vpack.c.b16 %v297, %v296
        %v326 = vpack.c.b16 %v299, %v298
        %v327 = vpack.c.b16 %v301, %v300
        %v328 = vpack.c.b16 %v303, %v302
        %v329 = vpack.c.b16 %v305, %v304
        %v330 = vpack.c.b16 %v307, %v306
        %v331 = vpack.c.b16 %v309, %v308
        %v332 = vpack.c.b16 %v311, %v310
        %v333 = vpack.c.b16 %v313, %v312
        %v334 = vpack.c.b16 %v315, %v314
        %v335 = vpack.c.b16 %v317, %v316
        %v336 = vpack.c.b16 %v319, %v318
        %v337 = vpack.c.b16 %v321, %v320
        %354 = vmatprep.subr.bf16.mxu0 0
        %355 = vmatpush1.bf16.msra.mxu0 %v329
        %356 = vmatprep.subr.bf16.mxu0 0
        %357 = vmatpush1.bf16.msra.mxu0 %v328
        %358 = vmatprep.subr.bf16.mxu0 0
        %359 = vmatpush1.bf16.msra.mxu0 %v327
        %360 = vmatprep.subr.bf16.mxu0 0
        %361 = vmatpush1.bf16.msra.mxu0 %v326
        %362 = vmatprep.subr.bf16.mxu0 0
        %363 = vmatpush1.bf16.msra.mxu0 %v325
        %364 = vmatprep.subr.bf16.mxu0 0
        %365 = vmatpush1.bf16.msra.mxu0 %v324
        %366 = vmatprep.subr.bf16.mxu0 0
        %367 = vmatpush1.bf16.msra.mxu0 %v323
        %368 = vmatprep.subr.bf16.mxu0 0
        %369 = vmatpush1.bf16.msra.mxu0 %v322
        %370 = vmatprep.subr.bf16.mxu0 0
        %371 = vmatpush2.bf16.msra.mxu0 %v337
        %372 = vmatprep.subr.bf16.mxu0 0
        %373 = vmatpush2.bf16.msra.mxu0 %v336
        %374 = vmatprep.subr.bf16.mxu0 0
        %375 = vmatpush2.bf16.msra.mxu0 %v335
        %376 = vmatprep.subr.bf16.mxu0 0
        %377 = vmatpush2.bf16.msra.mxu0 %v334
        %378 = vmatprep.subr.bf16.mxu0 0
        %379 = vmatpush2.bf16.msra.mxu0 %v333
        %380 = vmatprep.subr.bf16.mxu0 0
        %381 = vmatpush2.bf16.msra.mxu0 %v332
        %382 = vmatprep.subr.bf16.mxu0 0
        %383 = vmatpush2.bf16.msra.mxu0 %v331
        %384 = vmatprep.subr.bf16.mxu0 0
        %385 = vmatpush2.bf16.msra.mxu0 %v330
        %386 = vmatprep.mubr.bf16.mxu0 %v255
        %387 = vmatmul.mubr.bf16.gmra.mxu0 %v254
        %v388 = vpop.f32.mrf.mxu0
        %v389 = vadd.f32 0.0, %v388
        %v390 = vpop.f32.mrf.mxu0
        %v391 = vpop.f32.mrf.mxu0
        %v392 = vpop.f32.mrf.mxu0
        %393 = vdwg.mxu0
        %v394 = vld [vmem:[%s216] sm:$0xff]
        %396 = vset.pattern.permute.xlu0 0
        %397 = vperm.xlu0 %396, %v394
        %v398 = vpop.permute.xlu0 %397
        %v400 = vmul.f32 %v389, %v398
        %401 = vst [vmem:[%s203] sm:$0xff] %v400
        %s402 = sand.u32 %s117, 1
        %s403 = scalar_lea.sflag [#allocation3], %s402
        %s404 = sand.u32 %s117, 1
        %s405 = smul.addr %s404, 8
        %s406 = scalar_lea.vmem [#allocation2], %s405
        // Predicated region
        $region33: #{_forward.1} parent=31 // pred_check
          %p407 = pneg %p127
        $region34: #{_forward.1} parent=31 // pred_check_branch
          %409 = sbr.rel (%p407) target = $region36
        $region35: #{_forward.1} parent=31 // pred_region
          %s411 = ssub.s32 128, 128
          %412 = vsyncadd %s403, %s411
          %s413 = sadd.s32 %s21, %s22
          %s414 = smul.addr %s413, 128
          %s415 = scalar_lea.hbm %s3, %s414
          %s417 = sshll.u32 %s406, 4
          %s418 = int_to_ptr.vmem [resolvable:$true] %s417
          %420 = dma.vmem_to_hbm [thread:$0]  %s418, 128, %s415, %s403
        $region36: #{_forward.1} parent=31 // pred_fallthru
          _
      $region32: #{_forward.1} parent=5 // pred_fallthru
        _
      %p421 = scmp.le.s32.totalorder 2, %s12
      // Predicated region
      $region37: #{_forward.1} parent=5 // pred_check
        %p422 = pneg %p421
      $region38: #{_forward.1} parent=5 // pred_check_branch
        %424 = sbr.rel (%p422) target = $region40
      $region39: #{_forward.1} parent=5 // pred_region
        %s425 = ssub.s32 %s12, 2
        // Predicated region
        $region41: #{_forward.1} parent=39 // pred_check
          %p426 = pneg %p133
        $region42: #{_forward.1} parent=39 // pred_check_branch
          %428 = sbr.rel (%p426) target = $region44
        $region43: #{_forward.1} parent=39 // pred_region
          %s429 = sand.u32 %s118, 1
          %s430 = scalar_lea.sflag [#allocation3], %s429
          %s431 = sand.u32 %s118, 1
          %s432 = smul.addr %s431, 8
          %s433 = scalar_lea.vmem [#allocation2], %s432
          %434 = dma.done %s430, 128
        $region44: #{_forward.1} parent=39 // pred_fallthru
          _
      $region40: #{_forward.1} parent=5 // pred_fallthru
        _
    $region6: #{_forward.1} parent=1 // loop_footer
      %s16 = sadd.s32 1, %s12
    $region7: #{_forward.1} parent=1 // loop_footer_branch
      %11 = sbr.rel target = $region3
    $region8: #{_forward.1} parent=1 // loop_exit
      _
    %435 = vsyncpa [#allocation3], 1
    %s436 = scalar_lea.sflag [#allocation3], 1
    %437 = vsyncpa %s436, 1

</llo_original>
